<compile_context>
chip_gen: v7x
topology: tpu7x:2x2x1
jax: 0.10.0
libtpu: 0.0.40
codegen_flags: <defaults>
</compile_context>

<pallas_src>
from functools import partial

import jax
import jax.numpy as jnp
from jax.experimental import pallas as pl
from jax.experimental.pallas import tpu as pltpu


def _mlp_kernel(xt_ref, w1_ref, w2_ref, b2_ref, w3_ref, b3_ref, o_ref):
    x = xt_ref[...]                                                    # (8,   TB) bf16
    # Layer 1: bias folded into W1 via the ones-row of x (column 6 of W1 == b1).
    h1 = jnp.dot(w1_ref[...], x, preferred_element_type=jnp.float32)   # (64,  TB) f32
    h1 = jnp.maximum(h1, 0.0).astype(jnp.bfloat16)
    # Layer 2: bias + ReLU in f32, bf16 into the next dot.
    h2 = jnp.dot(w2_ref[...], h1, preferred_element_type=jnp.float32)  # (128, TB) f32
    h2 = jnp.maximum(h2 + b2_ref[...], 0.0).astype(jnp.bfloat16)
    # Layer 3: output rows padded 5 -> 8, pad rows of W3/b3 are zero.
    y = jnp.dot(w3_ref[...], h2, preferred_element_type=jnp.float32)   # (8,   TB) f32
    o_ref[...] = (y + b3_ref[...]).astype(o_ref.dtype)


@partial(jax.jit, static_argnames=("tile_b",))
def circulation_detector(x, w1, b1, w2, b2, w3, b3, *, tile_b=8192):
    """Forward pass matching the PyTorch module.

    x : (B, 6) float32
    w1: (64, 6),   b1: (64,)    -- PyTorch nn.Linear layouts (out, in) / (out,)
    w2: (128, 64), b2: (128,)
    w3: (5, 128),  b3: (5,)
    returns (B, 5) float32
    """
    B = x.shape[0]
    d_in_p, d_h1, d_h2, d_out_p = 8, 64, 128, 8   # feature dims padded to 8 sublanes

    # Lane-dense batch tiling: tile_b a multiple of 128, clamped to the padded batch.
    b_pad128 = ((B + 127) // 128) * 128
    tile_b = max(128, min(tile_b, b_pad128))
    # Prefer >= 2 grid steps so v7x megacore sharding has work for both cores.
    if tile_b >= b_pad128 and b_pad128 >= 256:
        tile_b = ((b_pad128 // 2 + 127) // 128) * 128
    b_pad = pl.cdiv(b_pad128, tile_b) * tile_b
    grid = (b_pad // tile_b,)

    # Input: transpose, pad 6 -> 8 rows, ones-row at index 6 (for the folded bias),
    # cast to bf16 (halves input DMA bytes).  Runs inside the same jit as the kernel.
    xt = jnp.zeros((d_in_p, b_pad), jnp.float32)
    xt = xt.at[:6, :B].set(x.T)
    xt = xt.at[6, :].set(1.0)
    xt = xt.astype(jnp.bfloat16)

    # Weights: bf16 MXU operands.  W1 extended with b1 as column 6; W3/b3 padded 5 -> 8.
    w1e = (jnp.zeros((d_h1, d_in_p), jnp.float32)
           .at[:, :6].set(w1).at[:, 6].set(b1).astype(jnp.bfloat16))
    w2b = w2.astype(jnp.bfloat16)
    b2c = b2.reshape(d_h2, 1).astype(jnp.float32)
    w3p = (jnp.zeros((d_out_p, d_h2), jnp.float32)
           .at[:5, :].set(w3).astype(jnp.bfloat16))
    b3p = jnp.zeros((d_out_p, 1), jnp.float32).at[:5, 0].set(b3)

    const = lambda i: (0, 0)  # weights/biases stay VMEM-resident across grid steps

    yt = pl.pallas_call(
        _mlp_kernel,
        out_shape=jax.ShapeDtypeStruct((d_out_p, b_pad), jnp.float32),
        grid=grid,
        in_specs=[
            pl.BlockSpec((d_in_p, tile_b), lambda i: (0, i)),   # X^T: tiled over batch
            pl.BlockSpec((d_h1, d_in_p), const),                # W1 (+ folded b1)
            pl.BlockSpec((d_h2, d_h1), const),                  # W2
            pl.BlockSpec((d_h2, 1), const),                     # b2
            pl.BlockSpec((d_out_p, d_h2), const),               # W3 (padded rows)
            pl.BlockSpec((d_out_p, 1), const),                  # b3 (padded rows)
        ],
        out_specs=pl.BlockSpec((d_out_p, tile_b), lambda i: (0, i)),  # Y^T lane-dense
        compiler_params=pltpu.CompilerParams(
            dimension_semantics=("parallel",),
        ),
    )(xt, w1e, w2b, b2c, w3p, b3p)

    return yt[:5, :B].T


def _init_linear(key, fan_in, fan_out):
    # Deterministic init mimicking torch.nn.Linear default (uniform +- 1/sqrt(fan_in)).
    kw, kb = jax.random.split(key)
    bound = 1.0 / (fan_in ** 0.5)
    w = jax.random.uniform(kw, (fan_out, fan_in), jnp.float32, -bound, bound)  # (out, in)
    b = jax.random.uniform(kb, (fan_out,), jnp.float32, -bound, bound)
    return w, b


def _reference(x, w1, b1, w2, b2, w3, b3):
    h1 = jnp.maximum(x @ w1.T + b1, 0.0)
    h2 = jnp.maximum(h1 @ w2.T + b2, 0.0)
    return h2 @ w3.T + b3


if __name__ == "__main__":
    key = jax.random.PRNGKey(0)
    kx, k1, k2, k3 = jax.random.split(key, 4)

    batch = 8
    x = jax.random.normal(kx, (batch, 6), jnp.float32)

    w1, b1 = _init_linear(k1, 6, 64)
    w2, b2 = _init_linear(k2, 64, 128)
    w3, b3 = _init_linear(k3, 128, 5)

    out = circulation_detector(x, w1, b1, w2, b2, w3, b3)
    out = jax.block_until_ready(out)

    ref = _reference(x, w1, b1, w2, b2, w3, b3)
    assert out.shape == (batch, 5)
    # bf16 matmul operands (f32 accumulation) -> loosened tolerance vs f32 reference.
    assert jnp.allclose(out, ref, atol=2e-2, rtol=2e-2), (
        f"max abs err {jnp.max(jnp.abs(out - ref))}")

    print("KERNEL_OK")
</pallas_src>

<mosaic_0001>
module attributes {stable_mosaic.version = 11 : i64} {
  func.func @_mlp_kernel(%arg0: i32, %arg1: memref<8x128xbf16, #tpu.memory_space<vmem>>, %arg2: memref<64x8xbf16, #tpu.memory_space<vmem>>, %arg3: memref<128x64xbf16, #tpu.memory_space<vmem>>, %arg4: memref<128x1xf32, #tpu.memory_space<vmem>>, %arg5: memref<8x128xbf16, #tpu.memory_space<vmem>>, %arg6: memref<8x1xf32, #tpu.memory_space<vmem>>, %arg7: memref<8x128xf32, #tpu.memory_space<vmem>>) attributes {dimension_semantics = [#tpu.dimension_semantics<parallel>], iteration_bounds = array<i64: 1>, scalar_prefetch = 0 : i64, scratch_operands = 0 : i64, tpu.core_type = #tpu.core_type<tc>, window_params = [{transform_indices = @transform_0, window_bounds = array<i64: 8, 128>}, {pipeline_mode = #tpu.pipeline_mode<synchronous>, transform_indices = @transform_1, window_bounds = array<i64: 64, 8>}, {pipeline_mode = #tpu.pipeline_mode<synchronous>, transform_indices = @transform_2, window_bounds = array<i64: 128, 64>}, {pipeline_mode = #tpu.pipeline_mode<synchronous>, transform_indices = @transform_3, window_bounds = array<i64: 128, 1>}, {pipeline_mode = #tpu.pipeline_mode<synchronous>, transform_indices = @transform_4, window_bounds = array<i64: 8, 128>}, {pipeline_mode = #tpu.pipeline_mode<synchronous>, transform_indices = @transform_5, window_bounds = array<i64: 8, 1>}, {transform_indices = @transform_6, window_bounds = array<i64: 8, 128>}]} {
    %c0 = arith.constant 0 : index
    %c0_0 = arith.constant 0 : index
    %0 = vector.load %arg1[%c0, %c0_0] : memref<8x128xbf16, #tpu.memory_space<vmem>>, vector<8x128xbf16>
    %c0_1 = arith.constant 0 : index
    %c0_2 = arith.constant 0 : index
    %1 = vector.load %arg2[%c0_1, %c0_2] : memref<64x8xbf16, #tpu.memory_space<vmem>>, vector<64x8xbf16>
    %cst = arith.constant dense<0.000000e+00> : vector<64x128xf32>
    %2 = tpu.matmul %1, %0, %cst {dimension_numbers = #tpu.dot_dimension_numbers<[1], [0], [0], [1], [0, 0, 1, 1], [], []>} : vector<64x8xbf16>, vector<8x128xbf16>, vector<64x128xf32> -> vector<64x128xf32>
    %cst_3 = arith.constant 0.000000e+00 : f32
    %3 = vector.broadcast %cst_3 : f32 to vector<64x128xf32>
    %4 = arith.maximumf %2, %3 : vector<64x128xf32>
    %5 = arith.truncf %4 : vector<64x128xf32> to vector<64x128xbf16>
    %c0_4 = arith.constant 0 : index
    %c0_5 = arith.constant 0 : index
    %6 = vector.load %arg3[%c0_4, %c0_5] : memref<128x64xbf16, #tpu.memory_space<vmem>>, vector<128x64xbf16>
    %cst_6 = arith.constant dense<0.000000e+00> : vector<128x128xf32>
    %7 = tpu.matmul %6, %5, %cst_6 {dimension_numbers = #tpu.dot_dimension_numbers<[1], [0], [0], [1], [0, 0, 1, 1], [], []>} : vector<128x64xbf16>, vector<64x128xbf16>, vector<128x128xf32> -> vector<128x128xf32>
    %c0_7 = arith.constant 0 : index
    %c0_8 = arith.constant 0 : index
    %8 = vector.load %arg4[%c0_7, %c0_8] : memref<128x1xf32, #tpu.memory_space<vmem>>, vector<128x1xf32>
    %9 = vector.broadcast %8 : vector<128x1xf32> to vector<128x128xf32>
    %10 = arith.addf %7, %9 : vector<128x128xf32>
    %cst_9 = arith.constant 0.000000e+00 : f32
    %11 = vector.broadcast %cst_9 : f32 to vector<128x128xf32>
    %12 = arith.maximumf %10, %11 : vector<128x128xf32>
    %13 = arith.truncf %12 : vector<128x128xf32> to vector<128x128xbf16>
    %c0_10 = arith.constant 0 : index
    %c0_11 = arith.constant 0 : index
    %14 = vector.load %arg5[%c0_10, %c0_11] : memref<8x128xbf16, #tpu.memory_space<vmem>>, vector<8x128xbf16>
    %cst_12 = arith.constant dense<0.000000e+00> : vector<8x128xf32>
    %15 = tpu.matmul %14, %13, %cst_12 {dimension_numbers = #tpu.dot_dimension_numbers<[1], [0], [0], [1], [0, 0, 1, 1], [], []>} : vector<8x128xbf16>, vector<128x128xbf16>, vector<8x128xf32> -> vector<8x128xf32>
    %c0_13 = arith.constant 0 : index
    %c0_14 = arith.constant 0 : index
    %16 = vector.load %arg6[%c0_13, %c0_14] : memref<8x1xf32, #tpu.memory_space<vmem>>, vector<8x1xf32>
    %17 = vector.broadcast %16 : vector<8x1xf32> to vector<8x128xf32>
    %18 = arith.addf %15, %17 : vector<8x128xf32>
    %c0_15 = arith.constant 0 : index
    %c0_16 = arith.constant 0 : index
    %19 = vector.load %arg7[%c0_15, %c0_16] : memref<8x128xf32, #tpu.memory_space<vmem>>, vector<8x128xf32>
    tpu.vector_store %arg7[%c0_15, %c0_16], %18 {strides = array<i32>} : memref<8x128xf32, #tpu.memory_space<vmem>>, vector<8x128xf32>,
    return
  }
  func.func @transform_0(%arg0: i32) -> (i32, i32) {
    %c0_i32 = arith.constant 0 : i32
    %c0_i32_0 = arith.constant 0 : i32
    return %c0_i32, %arg0 : i32, i32
  }
  func.func @transform_1(%arg0: i32) -> (i32, i32) {
    %c0_i32 = arith.constant 0 : i32
    %c0_i32_0 = arith.constant 0 : i32
    %c0_i32_1 = arith.constant 0 : i32
    return %c0_i32, %c0_i32_0 : i32, i32
  }
  func.func @transform_2(%arg0: i32) -> (i32, i32) {
    %c0_i32 = arith.constant 0 : i32
    %c0_i32_0 = arith.constant 0 : i32
    %c0_i32_1 = arith.constant 0 : i32
    return %c0_i32, %c0_i32_0 : i32, i32
  }
  func.func @transform_3(%arg0: i32) -> (i32, i32) {
    %c0_i32 = arith.constant 0 : i32
    %c0_i32_0 = arith.constant 0 : i32
    %c0_i32_1 = arith.constant 0 : i32
    return %c0_i32, %c0_i32_0 : i32, i32
  }
  func.func @transform_4(%arg0: i32) -> (i32, i32) {
    %c0_i32 = arith.constant 0 : i32
    %c0_i32_0 = arith.constant 0 : i32
    %c0_i32_1 = arith.constant 0 : i32
    return %c0_i32, %c0_i32_0 : i32, i32
  }
  func.func @transform_5(%arg0: i32) -> (i32, i32) {
    %c0_i32 = arith.constant 0 : i32
    %c0_i32_0 = arith.constant 0 : i32
    %c0_i32_1 = arith.constant 0 : i32
    return %c0_i32, %c0_i32_0 : i32, i32
  }
  func.func @transform_6(%arg0: i32) -> (i32, i32) {
    %c0_i32 = arith.constant 0 : i32
    %c0_i32_0 = arith.constant 0 : i32
    return %c0_i32, %arg0 : i32, i32
  }
}

</mosaic_0001>

<llo_original>
// kernel: circulation_detector.1
$region0: #{circulation_detector.1}
  #allocation0 [shape = 'u32[]', space=smem, size = 0x4, offset = 0x4, fixed_abs, tag = 'smem constant byte address 0x4 - core index']
  #allocation1 [shape = 'u32[144,128]{1,0:T(1,128)}', space=vmem, size = 0x12000, scoped, tag = 'internal scratch']
  %s0 = inlined_call_operand.vmem [shape: bf16[8,128], index: 0, kind: input, shape index: {}]
  %s1 = inlined_call_operand.vmem [shape: bf16[64,8], index: 1, kind: input, shape index: {}]
  %s2 = inlined_call_operand.vmem [shape: bf16[128,64], index: 2, kind: input, shape index: {}]
  %s3 = inlined_call_operand.vmem [shape: f32[128,1], index: 3, kind: input, shape index: {}]
  %s4 = inlined_call_operand.vmem [shape: bf16[8,128], index: 4, kind: input, shape index: {}]
  %s5 = inlined_call_operand.vmem [shape: f32[8,1], index: 5, kind: input, shape index: {}]
  %s6 = inlined_call_operand.vmem [shape: f32[8,128], index: 6, kind: output, shape index: {}]
  %s7 = sld [smem:[#allocation0]]
  $region34: #{circulation_detector.1} parent=0
    _
  %s9 = ssub.s32 1, %s7
  %s10 = scalar_select 0, %s9, %s7
  // Predicated region
  $region2: #{circulation_detector.1} parent=0 // pred_check
    _
  $region3: #{circulation_detector.1} parent=0 // pred_check_branch
    %12 = sbr.rel (0) target = $region5
  $region4: #{circulation_detector.1} parent=0 // pred_region
    _
  $region5: #{circulation_detector.1} parent=0 // pred_fallthru
    _
  // Predicated region
  $region6: #{circulation_detector.1} parent=0 // pred_check
    _
  $region7: #{circulation_detector.1} parent=0 // pred_check_branch
    %14 = sbr.rel (0) target = $region9
  $region8: #{circulation_detector.1} parent=0 // pred_region
    _
  $region9: #{circulation_detector.1} parent=0 // pred_fallthru
    _
  // Predicated region
  $region10: #{circulation_detector.1} parent=0 // pred_check
    _
  $region11: #{circulation_detector.1} parent=0 // pred_check_branch
    %16 = sbr.rel (0) target = $region13
  $region12: #{circulation_detector.1} parent=0 // pred_region
    _
  $region13: #{circulation_detector.1} parent=0 // pred_fallthru
    _
  // Predicated region
  $region14: #{circulation_detector.1} parent=0 // pred_check
    _
  $region15: #{circulation_detector.1} parent=0 // pred_check_branch
    %18 = sbr.rel (0) target = $region17
  $region16: #{circulation_detector.1} parent=0 // pred_region
    _
  $region17: #{circulation_detector.1} parent=0 // pred_fallthru
    _
  // Predicated region
  $region18: #{circulation_detector.1} parent=0 // pred_check
    _
  $region19: #{circulation_detector.1} parent=0 // pred_check_branch
    %20 = sbr.rel (0) target = $region21
  $region20: #{circulation_detector.1} parent=0 // pred_region
    _
  $region21: #{circulation_detector.1} parent=0 // pred_fallthru
    _
  // Predicated region
  $region22: #{circulation_detector.1} parent=0 // pred_check
    _
  $region23: #{circulation_detector.1} parent=0 // pred_check_branch
    %22 = sbr.rel (0) target = $region25
  $region24: #{circulation_detector.1} parent=0 // pred_region
    _
  $region25: #{circulation_detector.1} parent=0 // pred_fallthru
    _
  %v24 = vld [vmem:[%s0] sm:$0xf]
  %v25 = vld [vmem:[%s1] sm:$0xf]
  %v26 = vld [vmem:[%s1 + $0x4] sm:$0xf]
  %v27 = vld [vmem:[%s1 + $0x8] sm:$0xf]
  %v28 = vld [vmem:[%s1 + $0xc] sm:$0xf]
  %v29 = vld [vmem:[%s1 + $0x10] sm:$0xf]
  %v30 = vld [vmem:[%s1 + $0x14] sm:$0xf]
  %v31 = vld [vmem:[%s1 + $0x18] sm:$0xf]
  %v32 = vld [vmem:[%s1 + $0x1c] sm:$0xf]
  %v41 = vunpack.c.l.b16 %v25
  %v42 = vunpack.c.l.b16 %v26
  %v43 = vunpack.c.l.b16 %v27
  %v44 = vunpack.c.l.b16 %v28
  %v45 = vunpack.c.l.b16 %v29
  %v46 = vunpack.c.l.b16 %v30
  %v47 = vunpack.c.l.b16 %v31
  %v48 = vunpack.c.l.b16 %v32
  %v49 = vpack.c.b16 %v42, %v41
  %v50 = vpack.c.b16 %v44, %v43
  %v51 = vpack.c.b16 %v46, %v45
  %v52 = vpack.c.b16 %v48, %v47
  %vm53 = vcmask 64512
  %v55 = vsel %vm53, %v49, 0
  %v58 = vsel %vm53, %v50, 0
  %v61 = vsel %vm53, %v51, 0
  %v64 = vsel %vm53, %v52, 0
  %vm66 = vcmask 1043456
  %v68 = vsel %vm66, %v24, 0
  %70 = vmatprep.subr.bf16.mxu0 0
  %71 = vmatpush1.bf16.msra.mxu0 %v68
  %72 = vmatprep.subr.bf16.mxu0 0
  %73 = vmatpush1.bf16.msra.mxu0 0
  %74 = vmatprep.subr.bf16.mxu0 0
  %75 = vmatpush1.bf16.msra.mxu0 0
  %76 = vmatprep.subr.bf16.mxu0 0
  %77 = vmatpush1.bf16.msra.mxu0 0
  %78 = vmatprep.subr.bf16.mxu0 0
  %79 = vmatpush1.bf16.msra.mxu0 0
  %80 = vmatprep.subr.bf16.mxu0 0
  %81 = vmatpush1.bf16.msra.mxu0 0
  %82 = vmatprep.subr.bf16.mxu0 0
  %83 = vmatpush1.bf16.msra.mxu0 0
  %84 = vmatprep.subr.bf16.mxu0 0
  %85 = vmatpush1.bf16.msra.mxu0 0
  %86 = vmatprep.subr.bf16.mxu0 0
  %87 = vmatpush1.bf16.msra.mxu0 0
  %88 = vmatprep.subr.bf16.mxu0 0
  %89 = vmatpush1.bf16.msra.mxu0 0
  %90 = vmatprep.subr.bf16.mxu0 0
  %91 = vmatpush1.bf16.msra.mxu0 0
  %92 = vmatprep.subr.bf16.mxu0 0
  %93 = vmatpush1.bf16.msra.mxu0 0
  %94 = vmatprep.subr.bf16.mxu0 0
  %95 = vmatpush1.bf16.msra.mxu0 0
  %96 = vmatprep.subr.bf16.mxu0 0
  %97 = vmatpush1.bf16.msra.mxu0 0
  %98 = vmatprep.subr.bf16.mxu0 0
  %99 = vmatpush1.bf16.msra.mxu0 0
  %100 = vmatprep.subr.bf16.mxu0 0
  %101 = vmatpush1.bf16.msra.mxu0 0
  %102 = vmatprep.mubr.bf16.mxu0 0
  %103 = vmatmul.mubr.bf16.gmra.mrb[0].mxu0 %v55
  %v104 = vpop.f32.mrb[0].mxu0
  %v105 = vadd.f32 0.0, %v104
  %v106 = vpop.f32.mrb[0].mxu0
  %v107 = vpop.f32.mrb[0].mxu0
  %v108 = vadd.f32 0.0, %v107
  %v109 = vpop.f32.mrb[0].mxu0
  %110 = vmatprep.mubr.bf16.mxu0 0
  %111 = vmatmul.mubr.bf16.gmra.mrb[0].mxu0 %v58
  %v112 = vpop.f32.mrb[0].mxu0
  %v113 = vadd.f32 0.0, %v112
  %v114 = vpop.f32.mrb[0].mxu0
  %v115 = vpop.f32.mrb[0].mxu0
  %v116 = vadd.f32 0.0, %v115
  %v117 = vpop.f32.mrb[0].mxu0
  %118 = vmatprep.mubr.bf16.mxu0 0
  %119 = vmatmul.mubr.bf16.gmra.mrb[0].mxu0 %v61
  %v120 = vpop.f32.mrb[0].mxu0
  %v121 = vadd.f32 0.0, %v120
  %v122 = vpop.f32.mrb[0].mxu0
  %v123 = vpop.f32.mrb[0].mxu0
  %v124 = vadd.f32 0.0, %v123
  %v125 = vpop.f32.mrb[0].mxu0
  %126 = vmatprep.mubr.bf16.mxu0 0
  %127 = vmatmul.mubr.bf16.gmra.mrb[0].mxu0 %v64
  %v128 = vpop.f32.mrb[0].mxu0
  %v129 = vadd.f32 0.0, %v128
  %v130 = vpop.f32.mrb[0].mxu0
  %v131 = vpop.f32.mrb[0].mxu0
  %v132 = vadd.f32 0.0, %v131
  %v133 = vpop.f32.mrb[0].mxu0
  %134 = vdwg.mxu0
  %v135 = vmax.f32 %v105, 0.0
  %v136 = vmax.f32 %v108, 0.0
  %v137 = vmax.f32 %v113, 0.0
  %v138 = vmax.f32 %v116, 0.0
  %v139 = vmax.f32 %v121, 0.0
  %v140 = vmax.f32 %v124, 0.0
  %v141 = vmax.f32 %v129, 0.0
  %v142 = vmax.f32 %v132, 0.0
  %v143 = vpack.c.bf16 %v136, %v135
  %v144 = vpack.c.bf16 %v138, %v137
  %v145 = vpack.c.bf16 %v140, %v139
  %v146 = vpack.c.bf16 %v142, %v141
  %v147 = vld [vmem:[%s2] sm:$0xf]
  %v148 = vld [vmem:[%s2 + $0x4] sm:$0xf]
  %v149 = vld [vmem:[%s2 + $0x8] sm:$0xf]
  %v150 = vld [vmem:[%s2 + $0xc] sm:$0xf]
  %v151 = vld [vmem:[%s2 + $0x10] sm:$0xf]
  %v152 = vld [vmem:[%s2 + $0x14] sm:$0xf]
  %v153 = vld [vmem:[%s2 + $0x18] sm:$0xf]
  %v154 = vld [vmem:[%s2 + $0x1c] sm:$0xf]
  %v155 = vld [vmem:[%s2 + $0x20] sm:$0xf]
  %v156 = vld [vmem:[%s2 + $0x24] sm:$0xf]
  %v157 = vld [vmem:[%s2 + $0x28] sm:$0xf]
  %v158 = vld [vmem:[%s2 + $0x2c] sm:$0xf]
  %v159 = vld [vmem:[%s2 + $0x30] sm:$0xf]
  %v160 = vld [vmem:[%s2 + $0x34] sm:$0xf]
  %v161 = vld [vmem:[%s2 + $0x38] sm:$0xf]
  %v162 = vld [vmem:[%s2 + $0x3c] sm:$0xf]
  %v163 = vld [vmem:[%s3] sm:$0xff]
  %v164 = vld [vmem:[%s3 + $0x8] sm:$0xff]
  %v165 = vld [vmem:[%s3 + $0x10] sm:$0xff]
  %v166 = vld [vmem:[%s3 + $0x18] sm:$0xff]
  %v167 = vld [vmem:[%s3 + $0x20] sm:$0xff]
  %v168 = vld [vmem:[%s3 + $0x28] sm:$0xff]
  %v169 = vld [vmem:[%s3 + $0x30] sm:$0xff]
  %v170 = vld [vmem:[%s3 + $0x38] sm:$0xff]
  %v171 = vld [vmem:[%s3 + $0x40] sm:$0xff]
  %v172 = vld [vmem:[%s3 + $0x48] sm:$0xff]
  %v173 = vld [vmem:[%s3 + $0x50] sm:$0xff]
  %v174 = vld [vmem:[%s3 + $0x58] sm:$0xff]
  %v175 = vld [vmem:[%s3 + $0x60] sm:$0xff]
  %v176 = vld [vmem:[%s3 + $0x68] sm:$0xff]
  %v177 = vld [vmem:[%s3 + $0x70] sm:$0xff]
  %v178 = vld [vmem:[%s3 + $0x78] sm:$0xff]
  %180 = vset.pattern.permute.xlu0 0
  %181 = vperm.xlu0 %180, %v163
  %v182 = vpop.permute.xlu0 %181
  %185 = vset.pattern.permute.xlu0 0
  %186 = vperm.xlu0 %185, %v164
  %v187 = vpop.permute.xlu0 %186
  %190 = vset.pattern.permute.xlu0 0
  %191 = vperm.xlu0 %190, %v165
  %v192 = vpop.permute.xlu0 %191
  %195 = vset.pattern.permute.xlu0 0
  %196 = vperm.xlu0 %195, %v166
  %v197 = vpop.permute.xlu0 %196
  %200 = vset.pattern.permute.xlu0 0
  %201 = vperm.xlu0 %200, %v167
  %v202 = vpop.permute.xlu0 %201
  %205 = vset.pattern.permute.xlu0 0
  %206 = vperm.xlu0 %205, %v168
  %v207 = vpop.permute.xlu0 %206
  %210 = vset.pattern.permute.xlu0 0
  %211 = vperm.xlu0 %210, %v169
  %v212 = vpop.permute.xlu0 %211
  %215 = vset.pattern.permute.xlu0 0
  %216 = vperm.xlu0 %215, %v170
  %v217 = vpop.permute.xlu0 %216
  %220 = vset.pattern.permute.xlu0 0
  %221 = vperm.xlu0 %220, %v171
  %v222 = vpop.permute.xlu0 %221
  %225 = vset.pattern.permute.xlu0 0
  %226 = vperm.xlu0 %225, %v172
  %v227 = vpop.permute.xlu0 %226
  %230 = vset.pattern.permute.xlu0 0
  %231 = vperm.xlu0 %230, %v173
  %v232 = vpop.permute.xlu0 %231
  %235 = vset.pattern.permute.xlu0 0
  %236 = vperm.xlu0 %235, %v174
  %v237 = vpop.permute.xlu0 %236
  %240 = vset.pattern.permute.xlu0 0
  %241 = vperm.xlu0 %240, %v175
  %v242 = vpop.permute.xlu0 %241
  %245 = vset.pattern.permute.xlu0 0
  %246 = vperm.xlu0 %245, %v176
  %v247 = vpop.permute.xlu0 %246
  %250 = vset.pattern.permute.xlu0 0
  %251 = vperm.xlu0 %250, %v177
  %v252 = vpop.permute.xlu0 %251
  %255 = vset.pattern.permute.xlu0 0
  %256 = vperm.xlu0 %255, %v178
  %v257 = vpop.permute.xlu0 %256
  %v275 = vunpack.c.l.b16 %v147
  %v276 = vunpack.c.l.b16 %v148
  %v277 = vunpack.c.l.b16 %v149
  %v278 = vunpack.c.l.b16 %v150
  %v279 = vunpack.c.l.b16 %v151
  %v280 = vunpack.c.l.b16 %v152
  %v281 = vunpack.c.l.b16 %v153
  %v282 = vunpack.c.l.b16 %v154
  %v283 = vunpack.c.l.b16 %v155
  %v284 = vunpack.c.l.b16 %v156
  %v285 = vunpack.c.l.b16 %v157
  %v286 = vunpack.c.l.b16 %v158
  %v287 = vunpack.c.l.b16 %v159
  %v288 = vunpack.c.l.b16 %v160
  %v289 = vunpack.c.l.b16 %v161
  %v290 = vunpack.c.l.b16 %v162
  %v291 = vpack.c.b16 %v276, %v275
  %v292 = vpack.c.b16 %v278, %v277
  %v293 = vpack.c.b16 %v280, %v279
  %v294 = vpack.c.b16 %v282, %v281
  %v295 = vpack.c.b16 %v284, %v283
  %v296 = vpack.c.b16 %v286, %v285
  %v297 = vpack.c.b16 %v288, %v287
  %v298 = vpack.c.b16 %v290, %v289
  %vm299 = vcmask 523264
  %v301 = vsel %vm299, %v291, 0
  %v304 = vsel %vm299, %v292, 0
  %v307 = vsel %vm299, %v293, 0
  %v310 = vsel %vm299, %v294, 0
  %v313 = vsel %vm299, %v295, 0
  %v316 = vsel %vm299, %v296, 0
  %v319 = vsel %vm299, %v297, 0
  %v322 = vsel %vm299, %v298, 0
  %324 = vmatprep.subr.bf16.mxu0 0
  %325 = vmatpush1.bf16.msra.mxu0 %v143
  %326 = vmatprep.subr.bf16.mxu0 0
  %327 = vmatpush1.bf16.msra.mxu0 %v144
  %328 = vmatprep.subr.bf16.mxu0 0
  %329 = vmatpush1.bf16.msra.mxu0 %v145
  %330 = vmatprep.subr.bf16.mxu0 0
  %331 = vmatpush1.bf16.msra.mxu0 %v146
  %332 = vmatprep.subr.bf16.mxu0 0
  %333 = vmatpush1.bf16.msra.mxu0 0
  %334 = vmatprep.subr.bf16.mxu0 0
  %335 = vmatpush1.bf16.msra.mxu0 0
  %336 = vmatprep.subr.bf16.mxu0 0
  %337 = vmatpush1.bf16.msra.mxu0 0
  %338 = vmatprep.subr.bf16.mxu0 0
  %339 = vmatpush1.bf16.msra.mxu0 0
  %340 = vmatprep.subr.bf16.mxu0 0
  %341 = vmatpush1.bf16.msra.mxu0 0
  %342 = vmatprep.subr.bf16.mxu0 0
  %343 = vmatpush1.bf16.msra.mxu0 0
  %344 = vmatprep.subr.bf16.mxu0 0
  %345 = vmatpush1.bf16.msra.mxu0 0
  %346 = vmatprep.subr.bf16.mxu0 0
  %347 = vmatpush1.bf16.msra.mxu0 0
  %348 = vmatprep.subr.bf16.mxu0 0
  %349 = vmatpush1.bf16.msra.mxu0 0
  %350 = vmatprep.subr.bf16.mxu0 0
  %351 = vmatpush1.bf16.msra.mxu0 0
  %352 = vmatprep.subr.bf16.mxu0 0
  %353 = vmatpush1.bf16.msra.mxu0 0
  %354 = vmatprep.subr.bf16.mxu0 0
  %355 = vmatpush1.bf16.msra.mxu0 0
  %356 = vmatprep.mubr.bf16.mxu0 0
  %357 = vmatmul.mubr.bf16.gmra.mrb[0].mxu0 %v301
  %v358 = vpop.f32.mrb[0].mxu0
  %v359 = vadd.f32 %v182, %v358
  %v360 = vpop.f32.mrb[0].mxu0
  %v361 = vpop.f32.mrb[0].mxu0
  %v362 = vadd.f32 %v187, %v361
  %v363 = vpop.f32.mrb[0].mxu0
  %364 = vmatprep.mubr.bf16.mxu0 0
  %365 = vmatmul.mubr.bf16.gmra.mrb[0].mxu0 %v304
  %v366 = vpop.f32.mrb[0].mxu0
  %v367 = vadd.f32 %v192, %v366
  %v368 = vpop.f32.mrb[0].mxu0
  %v369 = vpop.f32.mrb[0].mxu0
  %v370 = vadd.f32 %v197, %v369
  %v371 = vpop.f32.mrb[0].mxu0
  %372 = vmatprep.mubr.bf16.mxu0 0
  %373 = vmatmul.mubr.bf16.gmra.mrb[0].mxu0 %v307
  %v374 = vpop.f32.mrb[0].mxu0
  %v375 = vadd.f32 %v202, %v374
  %v376 = vpop.f32.mrb[0].mxu0
  %v377 = vpop.f32.mrb[0].mxu0
  %v378 = vadd.f32 %v207, %v377
  %v379 = vpop.f32.mrb[0].mxu0
  %380 = vmatprep.mubr.bf16.mxu0 0
  %381 = vmatmul.mubr.bf16.gmra.mrb[0].mxu0 %v310
  %v382 = vpop.f32.mrb[0].mxu0
  %v383 = vadd.f32 %v212, %v382
  %v384 = vpop.f32.mrb[0].mxu0
  %v385 = vpop.f32.mrb[0].mxu0
  %v386 = vadd.f32 %v217, %v385
  %v387 = vpop.f32.mrb[0].mxu0
  %388 = vmatprep.mubr.bf16.mxu0 0
  %389 = vmatmul.mubr.bf16.gmra.mrb[0].mxu0 %v313
  %v390 = vpop.f32.mrb[0].mxu0
  %v391 = vadd.f32 %v222, %v390
  %v392 = vpop.f32.mrb[0].mxu0
  %v393 = vpop.f32.mrb[0].mxu0
  %v394 = vadd.f32 %v227, %v393
  %v395 = vpop.f32.mrb[0].mxu0
  %396 = vmatprep.mubr.bf16.mxu0 0
  %397 = vmatmul.mubr.bf16.gmra.mrb[0].mxu0 %v316
  %v398 = vpop.f32.mrb[0].mxu0
  %v399 = vadd.f32 %v232, %v398
  %v400 = vpop.f32.mrb[0].mxu0
  %v401 = vpop.f32.mrb[0].mxu0
  %v402 = vadd.f32 %v237, %v401
  %v403 = vpop.f32.mrb[0].mxu0
  %404 = vmatprep.mubr.bf16.mxu0 0
  %405 = vmatmul.mubr.bf16.gmra.mrb[0].mxu0 %v319
  %v406 = vpop.f32.mrb[0].mxu0
  %v407 = vadd.f32 %v242, %v406
  %v408 = vpop.f32.mrb[0].mxu0
  %v409 = vpop.f32.mrb[0].mxu0
  %v410 = vadd.f32 %v247, %v409
  %v411 = vpop.f32.mrb[0].mxu0
  %412 = vmatprep.mubr.bf16.mxu0 0
  %413 = vmatmul.mubr.bf16.gmra.mrb[0].mxu0 %v322
  %v414 = vpop.f32.mrb[0].mxu0
  %v415 = vadd.f32 %v252, %v414
  %v416 = vpop.f32.mrb[0].mxu0
  %v417 = vpop.f32.mrb[0].mxu0
  %v418 = vadd.f32 %v257, %v417
  %v419 = vpop.f32.mrb[0].mxu0
  %420 = vdwg.mxu0
  %v421 = vmax.f32 %v359, 0.0
  %v422 = vmax.f32 %v362, 0.0
  %v423 = vmax.f32 %v367, 0.0
  %v424 = vmax.f32 %v370, 0.0
  %v425 = vmax.f32 %v375, 0.0
  %v426 = vmax.f32 %v378, 0.0
  %v427 = vmax.f32 %v383, 0.0
  %v428 = vmax.f32 %v386, 0.0
  %v429 = vmax.f32 %v391, 0.0
  %v430 = vmax.f32 %v394, 0.0
  %v431 = vmax.f32 %v399, 0.0
  %v432 = vmax.f32 %v402, 0.0
  %v433 = vmax.f32 %v407, 0.0
  %v434 = vmax.f32 %v410, 0.0
  %v435 = vmax.f32 %v415, 0.0
  %v436 = vmax.f32 %v418, 0.0
  %v437 = vpack.c.bf16 %v422, %v421
  %v438 = vpack.c.bf16 %v424, %v423
  %v439 = vpack.c.bf16 %v426, %v425
  %v440 = vpack.c.bf16 %v428, %v427
  %v441 = vpack.c.bf16 %v430, %v429
  %v442 = vpack.c.bf16 %v432, %v431
  %v443 = vpack.c.bf16 %v434, %v433
  %v444 = vpack.c.bf16 %v436, %v435
  %v445 = vld [vmem:[%s4] sm:$0xf]
  %v446 = vld [vmem:[%s5] sm:$0xff]
  %448 = vset.pattern.permute.xlu0 0
  %449 = vperm.xlu0 %448, %v446
  %v450 = vpop.permute.xlu0 %449
  %452 = vmatprep.subr.bf16.mxu0 0
  %453 = vmatpush1.bf16.msra.mxu0 %v437
  %454 = vmatprep.subr.bf16.mxu0 0
  %455 = vmatpush1.bf16.msra.mxu0 %v438
  %456 = vmatprep.subr.bf16.mxu0 0
  %457 = vmatpush1.bf16.msra.mxu0 %v439
  %458 = vmatprep.subr.bf16.mxu0 0
  %459 = vmatpush1.bf16.msra.mxu0 %v440
  %460 = vmatprep.subr.bf16.mxu0 0
  %461 = vmatpush1.bf16.msra.mxu0 %v441
  %462 = vmatprep.subr.bf16.mxu0 0
  %463 = vmatpush1.bf16.msra.mxu0 %v442
  %464 = vmatprep.subr.bf16.mxu0 0
  %465 = vmatpush1.bf16.msra.mxu0 %v443
  %466 = vmatprep.subr.bf16.mxu0 0
  %467 = vmatpush1.bf16.msra.mxu0 %v444
  %468 = vmatprep.subr.bf16.mxu0 0
  %469 = vmatpush1.bf16.msra.mxu0 0
  %470 = vmatprep.subr.bf16.mxu0 0
  %471 = vmatpush1.bf16.msra.mxu0 0
  %472 = vmatprep.subr.bf16.mxu0 0
  %473 = vmatpush1.bf16.msra.mxu0 0
  %474 = vmatprep.subr.bf16.mxu0 0
  %475 = vmatpush1.bf16.msra.mxu0 0
  %476 = vmatprep.subr.bf16.mxu0 0
  %477 = vmatpush1.bf16.msra.mxu0 0
  %478 = vmatprep.subr.bf16.mxu0 0
  %479 = vmatpush1.bf16.msra.mxu0 0
  %480 = vmatprep.subr.bf16.mxu0 0
  %481 = vmatpush1.bf16.msra.mxu0 0
  %482 = vmatprep.subr.bf16.mxu0 0
  %483 = vmatpush1.bf16.msra.mxu0 0
  %484 = vmatprep.mubr.bf16.mxu0 0
  %485 = vmatmul.mubr.bf16.gmra.mrb[0].mxu0 %v445
  %v486 = vpop.f32.mrb[0].mxu0
  %v487 = vadd.f32 %v450, %v486
  %v488 = vpop.f32.mrb[0].mxu0
  %v489 = vpop.f32.mrb[0].mxu0
  %v490 = vpop.f32.mrb[0].mxu0
  %491 = vdwg.mxu0
  %492 = vst [vmem:[%s6] sm:$0xff] %v487
  // Predicated region
  $region26: #{circulation_detector.1} parent=0 // pred_check
    _
  $region27: #{circulation_detector.1} parent=0 // pred_check_branch
    %494 = sbr.rel (0) target = $region29
  $region28: #{circulation_detector.1} parent=0 // pred_region
    _
  $region29: #{circulation_detector.1} parent=0 // pred_fallthru
    _
  // Predicated region
  $region30: #{circulation_detector.1} parent=0 // pred_check
    _
  $region31: #{circulation_detector.1} parent=0 // pred_check_branch
    %496 = sbr.rel (0) target = $region33
  $region32: #{circulation_detector.1} parent=0 // pred_region
    _
  $region33: #{circulation_detector.1} parent=0 // pred_fallthru
    _

</llo_original>
